<compile_context>
chip_gen: v7x
topology: tpu7x:2x2x1
jax: 0.10.0
libtpu: 0.0.40
codegen_flags: <defaults>
</compile_context>

<pallas_src>
import jax
import jax.numpy as jnp
from jax import lax
from jax.experimental import pallas as pl
from jax.experimental.pallas import tpu as pltpu


def _rnn_kernel(x_ref, w_ih_t_ref, w_hh_t_ref, w_fc_t_ref, b_fc_ref, out_ref,
                u_scratch):
    # x_ref:      (T*BP, D) bf16  time-major, batch-padded, flattened input
    # w_ih_t_ref: (D, H)    bf16  = W_ih^T
    # w_hh_t_ref: (H, H)    bf16  = W_hh^T
    # w_fc_t_ref: (H, OP)   bf16  = W_fc^T zero-padded to OP=128 lanes
    # b_fc_ref:   (1, OP)   f32   bias zero-padded
    # out_ref:    (BP, OP)  f32   lane-dense logits (sliced to (B, O) outside)
    # u_scratch:  (T*BP, H) f32   hoisted input projection for all timesteps
    BP = out_ref.shape[0]
    H = w_hh_t_ref.shape[0]
    T = x_ref.shape[0] // BP

    # (1) Hoisted input projection: one big MXU matmul covering every timestep.
    u_scratch[...] = jnp.dot(x_ref[...], w_ih_t_ref[...],
                             preferred_element_type=jnp.float32)

    # (5) Load the recurrent weight once; it stays in vregs across the unrolled loop.
    w_hh_t = w_hh_t_ref[...]

    # (4) Hidden state lives in the fori_loop carry (vregs), not VMEM scratch.
    def step(t, h):
        row0 = pl.multiple_of(t * BP, BP)                 # aligned sublane slice
        u_t = u_scratch[pl.ds(row0, BP), :]               # (BP, H) f32
        pre = u_t + jnp.dot(h.astype(jnp.bfloat16), w_hh_t,
                            preferred_element_type=jnp.float32)
        return jnp.tanh(pre)                              # f32 tanh (EUP)

    h_last = lax.fori_loop(0, T, step, jnp.zeros((BP, H), jnp.float32),
                           unroll=(True if T <= 8 else 8))

    # Classifier on the last hidden state; lane-dense (OP = multiple of 128) store.
    logits = (jnp.dot(h_last.astype(jnp.bfloat16), w_fc_t_ref[...],
                      preferred_element_type=jnp.float32)
              + b_fc_ref[...])
    out_ref[...] = logits.astype(out_ref.dtype)


def rnn_classify_forward(x, w_ih, w_hh, w_fc, b_fc):
    """Forward pass of RNNModule (no labels -> returns logits).

    x:    (B, T, D)  batch-first, like the PyTorch module
    w_ih: (H, D)     nn.RNN weight_ih_l0
    w_hh: (H, H)     nn.RNN weight_hh_l0
    w_fc: (O, H)     nn.Linear weight
    b_fc: (O,)       nn.Linear bias
    returns (B, O) logits (float32)
    """
    B, T, D = x.shape
    H = w_hh.shape[0]
    O = w_fc.shape[0]

    BP = ((B + 7) // 8) * 8          # sublane-friendly padded batch
    OP = ((O + 127) // 128) * 128    # lane-dense padded output width

    # Time-major, batch-padded, flattened to (T*BP, D); bf16 matmul operands.
    x_tm = jnp.transpose(jnp.asarray(x, jnp.float32), (1, 0, 2))   # (T, B, D)
    x_tm = jnp.pad(x_tm, ((0, 0), (0, BP - B), (0, 0)))            # (T, BP, D)
    x_flat = x_tm.reshape(T * BP, D).astype(jnp.bfloat16)

    w_ih_t = jnp.asarray(w_ih).T.astype(jnp.bfloat16)              # (D, H)
    w_hh_t = jnp.asarray(w_hh).T.astype(jnp.bfloat16)              # (H, H)
    w_fc_t = (jnp.zeros((H, OP), jnp.bfloat16)
              .at[:, :O].set(jnp.asarray(w_fc).T.astype(jnp.bfloat16)))   # (H, OP)
    b_fc_p = (jnp.zeros((1, OP), jnp.float32)
              .at[:, :O].set(jnp.asarray(b_fc, jnp.float32)))             # (1, OP)

    vmem = pl.BlockSpec(memory_space=pltpu.MemorySpace.VMEM)

    out = pl.pallas_call(
        _rnn_kernel,
        out_shape=jax.ShapeDtypeStruct((BP, OP), jnp.float32),
        in_specs=[vmem, vmem, vmem, vmem, vmem],
        out_specs=vmem,
        scratch_shapes=[pltpu.VMEM((T * BP, H), jnp.float32)],   # hoisted projection
    )(x_flat, w_ih_t, w_hh_t, w_fc_t, b_fc_p)

    return out[:B, :O]


def _reference_forward(x, w_ih, w_hh, w_fc, b_fc):
    # Pure-JAX f32 reference mirroring torch.nn.RNN(tanh, no bias) + Linear semantics.
    B, T, D = x.shape
    H = w_hh.shape[0]
    h = jnp.zeros((B, H), jnp.float32)
    for t in range(T):
        h = jnp.tanh(x[:, t, :] @ w_ih.T + h @ w_hh.T)
    return h @ w_fc.T + b_fc


if __name__ == "__main__":
    # Small shapes consistent with the module: seq=8, input=16, hidden=32, output=4
    B, T, D, H, O = 2, 8, 16, 32, 4

    key = jax.random.PRNGKey(0)
    k0, k1, k2, k3, k4 = jax.random.split(key, 5)

    x = jax.random.normal(k0, (B, T, D), jnp.float32)
    # Deterministic synthetic parameters (uniform in [-1/sqrt(H), 1/sqrt(H)], torch-like scale)
    scale = 1.0 / jnp.sqrt(jnp.float32(H))
    w_ih = jax.random.uniform(k1, (H, D), jnp.float32, -scale, scale)
    w_hh = jax.random.uniform(k2, (H, H), jnp.float32, -scale, scale)
    w_fc = jax.random.uniform(k3, (O, H), jnp.float32, -scale, scale)
    b_fc = jax.random.uniform(k4, (O,), jnp.float32, -scale, scale)

    out = rnn_classify_forward(x, w_ih, w_hh, w_fc, b_fc)
    out = jax.block_until_ready(out)

    ref = _reference_forward(x, w_ih, w_hh, w_fc, b_fc)
    assert out.shape == (B, O)
    # Kernel uses bf16 matmul operands with f32 accumulation, so the tolerance vs. the
    # pure-f32 reference is deliberately loosened.
    assert jnp.allclose(out, ref, atol=5e-2, rtol=5e-2), (
        f"max abs diff {jnp.max(jnp.abs(out - ref))}")

    # TODO(synk): CrossEntropyLoss branch (y is not None) is training-time glue, not implemented here.
    print("KERNEL_OK")
</pallas_src>

<mosaic_0001>
module attributes {stable_mosaic.version = 11 : i64} {
  func.func @_rnn_kernel(%arg0: memref<64x16xbf16, #tpu.memory_space<vmem>>, %arg1: memref<16x32xbf16, #tpu.memory_space<vmem>>, %arg2: memref<32x32xbf16, #tpu.memory_space<vmem>>, %arg3: memref<32x128xbf16, #tpu.memory_space<vmem>>, %arg4: memref<1x128xf32, #tpu.memory_space<vmem>>, %arg5: memref<8x128xf32, #tpu.memory_space<vmem>>, %arg6: memref<64x32xf32, #tpu.memory_space<vmem>>) attributes {dimension_semantics = [], scalar_prefetch = 0 : i64, scratch_operands = 1 : i64, tpu.core_type = #tpu.core_type<tc>} {
    %c0 = arith.constant 0 : index
    %c0_0 = arith.constant 0 : index
    %0 = vector.load %arg0[%c0, %c0_0] : memref<64x16xbf16, #tpu.memory_space<vmem>>, vector<64x16xbf16>
    %c0_1 = arith.constant 0 : index
    %c0_2 = arith.constant 0 : index
    %1 = vector.load %arg1[%c0_1, %c0_2] : memref<16x32xbf16, #tpu.memory_space<vmem>>, vector<16x32xbf16>
    %cst = arith.constant dense<0.000000e+00> : vector<64x32xf32>
    %2 = tpu.matmul %0, %1, %cst {dimension_numbers = #tpu.dot_dimension_numbers<[1], [0], [0], [1], [0, 0, 1, 1], [], []>} : vector<64x16xbf16>, vector<16x32xbf16>, vector<64x32xf32> -> vector<64x32xf32>
    %c0_3 = arith.constant 0 : index
    %c0_4 = arith.constant 0 : index
    %3 = vector.load %arg6[%c0_3, %c0_4] : memref<64x32xf32, #tpu.memory_space<vmem>>, vector<64x32xf32>
    tpu.vector_store %arg6[%c0_3, %c0_4], %2 {strides = array<i32>} : memref<64x32xf32, #tpu.memory_space<vmem>>, vector<64x32xf32>,
    %c0_5 = arith.constant 0 : index
    %c0_6 = arith.constant 0 : index
    %4 = vector.load %arg2[%c0_5, %c0_6] : memref<32x32xbf16, #tpu.memory_space<vmem>>, vector<32x32xbf16>
    %cst_7 = arith.constant 0.000000e+00 : f32
    %5 = vector.broadcast %cst_7 : f32 to vector<8x32xf32>
    %c0_i32 = arith.constant 0 : i32
    %c8_i32 = arith.constant 8 : i32
    %6 = arith.muli %c0_i32, %c8_i32 : i32
    %7 = tpu.assume_multiple %6, 8 : i32
    %8 = arith.index_cast %7 : i32 to index
    %c0_8 = arith.constant 0 : index
    %9 = vector.load %arg6[%8, %c0_8] : memref<64x32xf32, #tpu.memory_space<vmem>>, vector<8x32xf32>
    %10 = arith.truncf %5 : vector<8x32xf32> to vector<8x32xbf16>
    %cst_9 = arith.constant dense<0.000000e+00> : vector<8x32xf32>
    %11 = tpu.matmul %10, %4, %cst_9 {dimension_numbers = #tpu.dot_dimension_numbers<[1], [0], [0], [1], [0, 0, 1, 1], [], []>} : vector<8x32xbf16>, vector<32x32xbf16>, vector<8x32xf32> -> vector<8x32xf32>
    %12 = arith.addf %9, %11 : vector<8x32xf32>
    %13 = math.tanh %12 : vector<8x32xf32>
    %c1_i32 = arith.constant 1 : i32
    %c8_i32_10 = arith.constant 8 : i32
    %14 = arith.muli %c1_i32, %c8_i32_10 : i32
    %15 = tpu.assume_multiple %14, 8 : i32
    %16 = arith.index_cast %15 : i32 to index
    %c0_11 = arith.constant 0 : index
    %17 = vector.load %arg6[%16, %c0_11] : memref<64x32xf32, #tpu.memory_space<vmem>>, vector<8x32xf32>
    %18 = arith.truncf %13 : vector<8x32xf32> to vector<8x32xbf16>
    %cst_12 = arith.constant dense<0.000000e+00> : vector<8x32xf32>
    %19 = tpu.matmul %18, %4, %cst_12 {dimension_numbers = #tpu.dot_dimension_numbers<[1], [0], [0], [1], [0, 0, 1, 1], [], []>} : vector<8x32xbf16>, vector<32x32xbf16>, vector<8x32xf32> -> vector<8x32xf32>
    %20 = arith.addf %17, %19 : vector<8x32xf32>
    %21 = math.tanh %20 : vector<8x32xf32>
    %c2_i32 = arith.constant 2 : i32
    %c8_i32_13 = arith.constant 8 : i32
    %22 = arith.muli %c2_i32, %c8_i32_13 : i32
    %23 = tpu.assume_multiple %22, 8 : i32
    %24 = arith.index_cast %23 : i32 to index
    %c0_14 = arith.constant 0 : index
    %25 = vector.load %arg6[%24, %c0_14] : memref<64x32xf32, #tpu.memory_space<vmem>>, vector<8x32xf32>
    %26 = arith.truncf %21 : vector<8x32xf32> to vector<8x32xbf16>
    %cst_15 = arith.constant dense<0.000000e+00> : vector<8x32xf32>
    %27 = tpu.matmul %26, %4, %cst_15 {dimension_numbers = #tpu.dot_dimension_numbers<[1], [0], [0], [1], [0, 0, 1, 1], [], []>} : vector<8x32xbf16>, vector<32x32xbf16>, vector<8x32xf32> -> vector<8x32xf32>
    %28 = arith.addf %25, %27 : vector<8x32xf32>
    %29 = math.tanh %28 : vector<8x32xf32>
    %c3_i32 = arith.constant 3 : i32
    %c8_i32_16 = arith.constant 8 : i32
    %30 = arith.muli %c3_i32, %c8_i32_16 : i32
    %31 = tpu.assume_multiple %30, 8 : i32
    %32 = arith.index_cast %31 : i32 to index
    %c0_17 = arith.constant 0 : index
    %33 = vector.load %arg6[%32, %c0_17] : memref<64x32xf32, #tpu.memory_space<vmem>>, vector<8x32xf32>
    %34 = arith.truncf %29 : vector<8x32xf32> to vector<8x32xbf16>
    %cst_18 = arith.constant dense<0.000000e+00> : vector<8x32xf32>
    %35 = tpu.matmul %34, %4, %cst_18 {dimension_numbers = #tpu.dot_dimension_numbers<[1], [0], [0], [1], [0, 0, 1, 1], [], []>} : vector<8x32xbf16>, vector<32x32xbf16>, vector<8x32xf32> -> vector<8x32xf32>
    %36 = arith.addf %33, %35 : vector<8x32xf32>
    %37 = math.tanh %36 : vector<8x32xf32>
    %c4_i32 = arith.constant 4 : i32
    %c8_i32_19 = arith.constant 8 : i32
    %38 = arith.muli %c4_i32, %c8_i32_19 : i32
    %39 = tpu.assume_multiple %38, 8 : i32
    %40 = arith.index_cast %39 : i32 to index
    %c0_20 = arith.constant 0 : index
    %41 = vector.load %arg6[%40, %c0_20] : memref<64x32xf32, #tpu.memory_space<vmem>>, vector<8x32xf32>
    %42 = arith.truncf %37 : vector<8x32xf32> to vector<8x32xbf16>
    %cst_21 = arith.constant dense<0.000000e+00> : vector<8x32xf32>
    %43 = tpu.matmul %42, %4, %cst_21 {dimension_numbers = #tpu.dot_dimension_numbers<[1], [0], [0], [1], [0, 0, 1, 1], [], []>} : vector<8x32xbf16>, vector<32x32xbf16>, vector<8x32xf32> -> vector<8x32xf32>
    %44 = arith.addf %41, %43 : vector<8x32xf32>
    %45 = math.tanh %44 : vector<8x32xf32>
    %c5_i32 = arith.constant 5 : i32
    %c8_i32_22 = arith.constant 8 : i32
    %46 = arith.muli %c5_i32, %c8_i32_22 : i32
    %47 = tpu.assume_multiple %46, 8 : i32
    %48 = arith.index_cast %47 : i32 to index
    %c0_23 = arith.constant 0 : index
    %49 = vector.load %arg6[%48, %c0_23] : memref<64x32xf32, #tpu.memory_space<vmem>>, vector<8x32xf32>
    %50 = arith.truncf %45 : vector<8x32xf32> to vector<8x32xbf16>
    %cst_24 = arith.constant dense<0.000000e+00> : vector<8x32xf32>
    %51 = tpu.matmul %50, %4, %cst_24 {dimension_numbers = #tpu.dot_dimension_numbers<[1], [0], [0], [1], [0, 0, 1, 1], [], []>} : vector<8x32xbf16>, vector<32x32xbf16>, vector<8x32xf32> -> vector<8x32xf32>
    %52 = arith.addf %49, %51 : vector<8x32xf32>
    %53 = math.tanh %52 : vector<8x32xf32>
    %c6_i32 = arith.constant 6 : i32
    %c8_i32_25 = arith.constant 8 : i32
    %54 = arith.muli %c6_i32, %c8_i32_25 : i32
    %55 = tpu.assume_multiple %54, 8 : i32
    %56 = arith.index_cast %55 : i32 to index
    %c0_26 = arith.constant 0 : index
    %57 = vector.load %arg6[%56, %c0_26] : memref<64x32xf32, #tpu.memory_space<vmem>>, vector<8x32xf32>
    %58 = arith.truncf %53 : vector<8x32xf32> to vector<8x32xbf16>
    %cst_27 = arith.constant dense<0.000000e+00> : vector<8x32xf32>
    %59 = tpu.matmul %58, %4, %cst_27 {dimension_numbers = #tpu.dot_dimension_numbers<[1], [0], [0], [1], [0, 0, 1, 1], [], []>} : vector<8x32xbf16>, vector<32x32xbf16>, vector<8x32xf32> -> vector<8x32xf32>
    %60 = arith.addf %57, %59 : vector<8x32xf32>
    %61 = math.tanh %60 : vector<8x32xf32>
    %c7_i32 = arith.constant 7 : i32
    %c8_i32_28 = arith.constant 8 : i32
    %62 = arith.muli %c7_i32, %c8_i32_28 : i32
    %63 = tpu.assume_multiple %62, 8 : i32
    %64 = arith.index_cast %63 : i32 to index
    %c0_29 = arith.constant 0 : index
    %65 = vector.load %arg6[%64, %c0_29] : memref<64x32xf32, #tpu.memory_space<vmem>>, vector<8x32xf32>
    %66 = arith.truncf %61 : vector<8x32xf32> to vector<8x32xbf16>
    %cst_30 = arith.constant dense<0.000000e+00> : vector<8x32xf32>
    %67 = tpu.matmul %66, %4, %cst_30 {dimension_numbers = #tpu.dot_dimension_numbers<[1], [0], [0], [1], [0, 0, 1, 1], [], []>} : vector<8x32xbf16>, vector<32x32xbf16>, vector<8x32xf32> -> vector<8x32xf32>
    %68 = arith.addf %65, %67 : vector<8x32xf32>
    %69 = math.tanh %68 : vector<8x32xf32>
    %c8_i32_31 = arith.constant 8 : i32
    %70 = arith.truncf %69 : vector<8x32xf32> to vector<8x32xbf16>
    %c0_32 = arith.constant 0 : index
    %c0_33 = arith.constant 0 : index
    %71 = vector.load %arg3[%c0_32, %c0_33] : memref<32x128xbf16, #tpu.memory_space<vmem>>, vector<32x128xbf16>
    %cst_34 = arith.constant dense<0.000000e+00> : vector<8x128xf32>
    %72 = tpu.matmul %70, %71, %cst_34 {dimension_numbers = #tpu.dot_dimension_numbers<[1], [0], [0], [1], [0, 0, 1, 1], [], []>} : vector<8x32xbf16>, vector<32x128xbf16>, vector<8x128xf32> -> vector<8x128xf32>
    %c0_35 = arith.constant 0 : index
    %c0_36 = arith.constant 0 : index
    %73 = vector.load %arg4[%c0_35, %c0_36] : memref<1x128xf32, #tpu.memory_space<vmem>>, vector<1x128xf32>
    %74 = vector.broadcast %73 : vector<1x128xf32> to vector<8x128xf32>
    %75 = arith.addf %72, %74 : vector<8x128xf32>
    %c0_37 = arith.constant 0 : index
    %c0_38 = arith.constant 0 : index
    %76 = vector.load %arg5[%c0_37, %c0_38] : memref<8x128xf32, #tpu.memory_space<vmem>>, vector<8x128xf32>
    tpu.vector_store %arg5[%c0_37, %c0_38], %75 {strides = array<i32>} : memref<8x128xf32, #tpu.memory_space<vmem>>, vector<8x128xf32>,
    return
  }
}

</mosaic_0001>

<llo_original>
// kernel: tpu_custom_call.1
$region0: #{tpu_custom_call.1}
  #allocation0 [shape = 'u32[]', space=smem, size = 0x4, offset = 0x4, fixed_abs, tag = 'smem constant byte address 0x4 - core index']
  #allocation1 [shape = 'u32[144,128]{1,0:T(1,128)}', space=vmem, size = 0x12000, scoped, tag = 'internal scratch']
  #allocation2 [shape = 'f32[64,32]{1,0:T(8,128)}', space=vmem, size = 0x8000, scoped, tag = 'scratch operand']
  %s0 = inlined_call_operand.vmem [shape: bf16[64,16], index: 0, kind: input, shape index: {}]
  %s1 = inlined_call_operand.vmem [shape: bf16[16,32], index: 1, kind: input, shape index: {}]
  %s2 = inlined_call_operand.vmem [shape: bf16[32,32], index: 2, kind: input, shape index: {}]
  %s3 = inlined_call_operand.vmem [shape: bf16[32,128], index: 3, kind: input, shape index: {}]
  %s4 = inlined_call_operand.vmem [shape: f32[1,128], index: 4, kind: input, shape index: {}]
  %s5 = inlined_call_operand.hbm [shape: f32[8,128], index: 5, kind: output, shape index: {}]
  %s6 = sld [smem:[#allocation0]]
  $region30: #{tpu_custom_call.1} parent=0
    _
  %s8 = ssub.s32 1, %s6
  %s9 = scalar_select 0, %s8, %s6
  $region1: #{tpu_custom_call.1} parent=0
    #allocation3 [shape = 'u8[4096]{0}', space=vmem, size = 0x1000, scoped, tag = 'output window, operand 0, single buffered']
    #allocation4 [shape = 's32[1]{0}', space=sflag, size = 0x4, scoped, tag = 'scoped memory for tpu_custom_call.1']
    %10 = vsyncpa [#allocation4], 0
    // Predicated region
    $region2: #{tpu_custom_call.1} parent=1 // pred_check
      _
    $region3: #{tpu_custom_call.1} parent=1 // pred_check_branch
      %12 = sbr.rel (0) target = $region5
    $region4: #{tpu_custom_call.1} parent=1 // pred_region
      _
    $region5: #{tpu_custom_call.1} parent=1 // pred_fallthru
      _
    // Predicated region
    $region6: #{tpu_custom_call.1} parent=1 // pred_check
      _
    $region7: #{tpu_custom_call.1} parent=1 // pred_check_branch
      %14 = sbr.rel (0) target = $region9
    $region8: #{tpu_custom_call.1} parent=1 // pred_region
      _
    $region9: #{tpu_custom_call.1} parent=1 // pred_fallthru
      _
    // Predicated region
    $region10: #{tpu_custom_call.1} parent=1 // pred_check
      _
    $region11: #{tpu_custom_call.1} parent=1 // pred_check_branch
      %16 = sbr.rel (0) target = $region13
    $region12: #{tpu_custom_call.1} parent=1 // pred_region
      _
    $region13: #{tpu_custom_call.1} parent=1 // pred_fallthru
      _
    // Predicated region
    $region14: #{tpu_custom_call.1} parent=1 // pred_check
      _
    $region15: #{tpu_custom_call.1} parent=1 // pred_check_branch
      %18 = sbr.rel (0) target = $region17
    $region16: #{tpu_custom_call.1} parent=1 // pred_region
      _
    $region17: #{tpu_custom_call.1} parent=1 // pred_fallthru
      _
    // Predicated region
    $region18: #{tpu_custom_call.1} parent=1 // pred_check
      _
    $region19: #{tpu_custom_call.1} parent=1 // pred_check_branch
      %20 = sbr.rel (0) target = $region21
    $region20: #{tpu_custom_call.1} parent=1 // pred_region
      _
    $region21: #{tpu_custom_call.1} parent=1 // pred_fallthru
      _
    %v22 = vld [vmem:[%s0] sm:$0xf]
    %v23 = vld [vmem:[%s0 + $0x4] sm:$0xf]
    %v24 = vld [vmem:[%s0 + $0x8] sm:$0xf]
    %v25 = vld [vmem:[%s0 + $0xc] sm:$0xf]
    %v26 = vld [vmem:[%s0 + $0x10] sm:$0xf]
    %v27 = vld [vmem:[%s0 + $0x14] sm:$0xf]
    %v28 = vld [vmem:[%s0 + $0x18] sm:$0xf]
    %v29 = vld [vmem:[%s0 + $0x1c] sm:$0xf]
    %v30 = vld [vmem:[%s1] sm:$0xf]
    %v31 = vld [vmem:[%s1 + $0x4] sm:$0xf]
    %v40 = vunpack.c.l.b16 %v22
    %v41 = vunpack.c.l.b16 %v23
    %v42 = vunpack.c.l.b16 %v24
    %v43 = vunpack.c.l.b16 %v25
    %v44 = vunpack.c.l.b16 %v26
    %v45 = vunpack.c.l.b16 %v27
    %v46 = vunpack.c.l.b16 %v28
    %v47 = vunpack.c.l.b16 %v29
    %v48 = vpack.c.b16 %v41, %v40
    %v49 = vpack.c.b16 %v43, %v42
    %v50 = vpack.c.b16 %v45, %v44
    %v51 = vpack.c.b16 %v47, %v46
    %v54 = vunpack.c.l.b16 %v30
    %v55 = vunpack.c.l.b16 %v31
    %v56 = vpack.c.b16 %v55, %v54
    %vm58 = vcmask 130048
    %v60 = vsel %vm58, %v48, 0
    %v63 = vsel %vm58, %v49, 0
    %v66 = vsel %vm58, %v50, 0
    %v69 = vsel %vm58, %v51, 0
    %71 = vmatprep.subr.bf16.mxu0 0
    %72 = vmatpush1.bf16.msra.mxu0 %v56
    %73 = vmatprep.subr.bf16.mxu0 0
    %74 = vmatpush1.bf16.msra.mxu0 0
    %75 = vmatprep.subr.bf16.mxu0 0
    %76 = vmatpush1.bf16.msra.mxu0 0
    %77 = vmatprep.subr.bf16.mxu0 0
    %78 = vmatpush1.bf16.msra.mxu0 0
    %79 = vmatprep.subr.bf16.mxu0 0
    %80 = vmatpush1.bf16.msra.mxu0 0
    %81 = vmatprep.subr.bf16.mxu0 0
    %82 = vmatpush1.bf16.msra.mxu0 0
    %83 = vmatprep.subr.bf16.mxu0 0
    %84 = vmatpush1.bf16.msra.mxu0 0
    %85 = vmatprep.subr.bf16.mxu0 0
    %86 = vmatpush1.bf16.msra.mxu0 0
    %87 = vmatprep.subr.bf16.mxu0 0
    %88 = vmatpush1.bf16.msra.mxu0 0
    %89 = vmatprep.subr.bf16.mxu0 0
    %90 = vmatpush1.bf16.msra.mxu0 0
    %91 = vmatprep.subr.bf16.mxu0 0
    %92 = vmatpush1.bf16.msra.mxu0 0
    %93 = vmatprep.subr.bf16.mxu0 0
    %94 = vmatpush1.bf16.msra.mxu0 0
    %95 = vmatprep.subr.bf16.mxu0 0
    %96 = vmatpush1.bf16.msra.mxu0 0
    %97 = vmatprep.subr.bf16.mxu0 0
    %98 = vmatpush1.bf16.msra.mxu0 0
    %99 = vmatprep.subr.bf16.mxu0 0
    %100 = vmatpush1.bf16.msra.mxu0 0
    %101 = vmatprep.subr.bf16.mxu0 0
    %102 = vmatpush1.bf16.msra.mxu0 0
    %103 = vmatprep.mubr.bf16.mxu0 0
    %104 = vmatmul.mubr.bf16.gmra.mrb[0].mxu0 %v60
    %v105 = vpop.f32.mrb[0].mxu0
    %v106 = vadd.f32 0.0, %v105
    %v107 = vpop.f32.mrb[0].mxu0
    %v108 = vpop.f32.mrb[0].mxu0
    %v109 = vadd.f32 0.0, %v108
    %v110 = vpop.f32.mrb[0].mxu0
    %111 = vmatprep.mubr.bf16.mxu0 0
    %112 = vmatmul.mubr.bf16.gmra.mrb[0].mxu0 %v63
    %v113 = vpop.f32.mrb[0].mxu0
    %v114 = vadd.f32 0.0, %v113
    %v115 = vpop.f32.mrb[0].mxu0
    %v116 = vpop.f32.mrb[0].mxu0
    %v117 = vadd.f32 0.0, %v116
    %v118 = vpop.f32.mrb[0].mxu0
    %119 = vmatprep.mubr.bf16.mxu0 0
    %120 = vmatmul.mubr.bf16.gmra.mrb[0].mxu0 %v66
    %v121 = vpop.f32.mrb[0].mxu0
    %v122 = vadd.f32 0.0, %v121
    %v123 = vpop.f32.mrb[0].mxu0
    %v124 = vpop.f32.mrb[0].mxu0
    %v125 = vadd.f32 0.0, %v124
    %v126 = vpop.f32.mrb[0].mxu0
    %127 = vmatprep.mubr.bf16.mxu0 0
    %128 = vmatmul.mubr.bf16.gmra.mrb[0].mxu0 %v69
    %v129 = vpop.f32.mrb[0].mxu0
    %v130 = vadd.f32 0.0, %v129
    %v131 = vpop.f32.mrb[0].mxu0
    %v132 = vpop.f32.mrb[0].mxu0
    %v133 = vadd.f32 0.0, %v132
    %v134 = vpop.f32.mrb[0].mxu0
    %135 = vdwg.mxu0
    %vm136 = vcmask 261120
    %137 = vst.msk [vmem:[#allocation2] sm:$0xff] %vm136, %v106
    %138 = vst.msk [vmem:[#allocation2 + $0x8] sm:$0xff] %vm136, %v109
    %139 = vst.msk [vmem:[#allocation2 + $0x10] sm:$0xff] %vm136, %v114
    %140 = vst.msk [vmem:[#allocation2 + $0x18] sm:$0xff] %vm136, %v117
    %141 = vst.msk [vmem:[#allocation2 + $0x20] sm:$0xff] %vm136, %v122
    %142 = vst.msk [vmem:[#allocation2 + $0x28] sm:$0xff] %vm136, %v125
    %143 = vst.msk [vmem:[#allocation2 + $0x30] sm:$0xff] %vm136, %v130
    %144 = vst.msk [vmem:[#allocation2 + $0x38] sm:$0xff] %vm136, %v133
    %v145 = vld [vmem:[%s2] sm:$0xf]
    %v146 = vld [vmem:[%s2 + $0x4] sm:$0xf]
    %v147 = vld [vmem:[%s2 + $0x8] sm:$0xf]
    %v148 = vld [vmem:[%s2 + $0xc] sm:$0xf]
    %v149 = vld [vmem:[#allocation2] sm:$0xff]
    %v154 = vunpack.c.l.b16 %v145
    %v155 = vunpack.c.l.b16 %v146
    %v156 = vunpack.c.l.b16 %v147
    %v157 = vunpack.c.l.b16 %v148
    %v158 = vpack.c.b16 %v155, %v154
    %v159 = vpack.c.b16 %v157, %v156
    %v163 = vsel %vm136, 0, 0
    %165 = vmatprep.subr.bf16.mxu0 0
    %166 = vmatpush1.bf16.msra.mxu0 %v158
    %167 = vmatprep.subr.bf16.mxu0 0
    %168 = vmatpush1.bf16.msra.mxu0 %v159
    %169 = vmatprep.subr.bf16.mxu0 0
    %170 = vmatpush1.bf16.msra.mxu0 0
    %171 = vmatprep.subr.bf16.mxu0 0
    %172 = vmatpush1.bf16.msra.mxu0 0
    %173 = vmatprep.subr.bf16.mxu0 0
    %174 = vmatpush1.bf16.msra.mxu0 0
    %175 = vmatprep.subr.bf16.mxu0 0
    %176 = vmatpush1.bf16.msra.mxu0 0
    %177 = vmatprep.subr.bf16.mxu0 0
    %178 = vmatpush1.bf16.msra.mxu0 0
    %179 = vmatprep.subr.bf16.mxu0 0
    %180 = vmatpush1.bf16.msra.mxu0 0
    %181 = vmatprep.subr.bf16.mxu0 0
    %182 = vmatpush1.bf16.msra.mxu0 0
    %183 = vmatprep.subr.bf16.mxu0 0
    %184 = vmatpush1.bf16.msra.mxu0 0
    %185 = vmatprep.subr.bf16.mxu0 0
    %186 = vmatpush1.bf16.msra.mxu0 0
    %187 = vmatprep.subr.bf16.mxu0 0
    %188 = vmatpush1.bf16.msra.mxu0 0
    %189 = vmatprep.subr.bf16.mxu0 0
    %190 = vmatpush1.bf16.msra.mxu0 0
    %191 = vmatprep.subr.bf16.mxu0 0
    %192 = vmatpush1.bf16.msra.mxu0 0
    %193 = vmatprep.subr.bf16.mxu0 0
    %194 = vmatpush1.bf16.msra.mxu0 0
    %195 = vmatprep.subr.bf16.mxu0 0
    %196 = vmatpush1.bf16.msra.mxu0 0
    %197 = vmatprep.mubr.bf16.mxu0 0
    %198 = vmatmul.mubr.bf16.gmra.mrb[0].mxu0 %v163
    %v199 = vpop.f32.mrb[0].mxu0
    %v200 = vadd.f32 0.0, %v199
    %v201 = vpop.f32.mrb[0].mxu0
    %v202 = vpop.f32.mrb[0].mxu0
    %v203 = vpop.f32.mrb[0].mxu0
    %204 = vdwg.mxu0
    %v205 = vadd.f32 %v149, %v200
    %v206 = vtanh.pop %v205
    %s207 = scalar_lea.vmem [#allocation2], 8
    %v208 = vld [vmem:[%s207] sm:$0xff]
    %v209 = vpack.c.bf16 %v206, %v206
    %v211 = vsel %vm136, %v209, 0
    %213 = vmatprep.subr.bf16.mxu0 0
    %214 = vmatpush1.bf16.msra.mxu0 %v158
    %215 = vmatprep.subr.bf16.mxu0 0
    %216 = vmatpush1.bf16.msra.mxu0 %v159
    %217 = vmatprep.subr.bf16.mxu0 0
    %218 = vmatpush1.bf16.msra.mxu0 0
    %219 = vmatprep.subr.bf16.mxu0 0
    %220 = vmatpush1.bf16.msra.mxu0 0
    %221 = vmatprep.subr.bf16.mxu0 0
    %222 = vmatpush1.bf16.msra.mxu0 0
    %223 = vmatprep.subr.bf16.mxu0 0
    %224 = vmatpush1.bf16.msra.mxu0 0
    %225 = vmatprep.subr.bf16.mxu0 0
    %226 = vmatpush1.bf16.msra.mxu0 0
    %227 = vmatprep.subr.bf16.mxu0 0
    %228 = vmatpush1.bf16.msra.mxu0 0
    %229 = vmatprep.subr.bf16.mxu0 0
    %230 = vmatpush1.bf16.msra.mxu0 0
    %231 = vmatprep.subr.bf16.mxu0 0
    %232 = vmatpush1.bf16.msra.mxu0 0
    %233 = vmatprep.subr.bf16.mxu0 0
    %234 = vmatpush1.bf16.msra.mxu0 0
    %235 = vmatprep.subr.bf16.mxu0 0
    %236 = vmatpush1.bf16.msra.mxu0 0
    %237 = vmatprep.subr.bf16.mxu0 0
    %238 = vmatpush1.bf16.msra.mxu0 0
    %239 = vmatprep.subr.bf16.mxu0 0
    %240 = vmatpush1.bf16.msra.mxu0 0
    %241 = vmatprep.subr.bf16.mxu0 0
    %242 = vmatpush1.bf16.msra.mxu0 0
    %243 = vmatprep.subr.bf16.mxu0 0
    %244 = vmatpush1.bf16.msra.mxu0 0
    %245 = vmatprep.mubr.bf16.mxu0 0
    %246 = vmatmul.mubr.bf16.gmra.mrb[0].mxu0 %v211
    %v247 = vpop.f32.mrb[0].mxu0
    %v248 = vadd.f32 0.0, %v247
    %v249 = vpop.f32.mrb[0].mxu0
    %v250 = vpop.f32.mrb[0].mxu0
    %v251 = vpop.f32.mrb[0].mxu0
    %252 = vdwg.mxu0
    %v253 = vadd.f32 %v208, %v248
    %v254 = vtanh.pop %v253
    %s255 = scalar_lea.vmem [#allocation2], 16
    %v256 = vld [vmem:[%s255] sm:$0xff]
    %v257 = vpack.c.bf16 %v254, %v254
    %v259 = vsel %vm136, %v257, 0
    %261 = vmatprep.subr.bf16.mxu0 0
    %262 = vmatpush1.bf16.msra.mxu0 %v158
    %263 = vmatprep.subr.bf16.mxu0 0
    %264 = vmatpush1.bf16.msra.mxu0 %v159
    %265 = vmatprep.subr.bf16.mxu0 0
    %266 = vmatpush1.bf16.msra.mxu0 0
    %267 = vmatprep.subr.bf16.mxu0 0
    %268 = vmatpush1.bf16.msra.mxu0 0
    %269 = vmatprep.subr.bf16.mxu0 0
    %270 = vmatpush1.bf16.msra.mxu0 0
    %271 = vmatprep.subr.bf16.mxu0 0
    %272 = vmatpush1.bf16.msra.mxu0 0
    %273 = vmatprep.subr.bf16.mxu0 0
    %274 = vmatpush1.bf16.msra.mxu0 0
    %275 = vmatprep.subr.bf16.mxu0 0
    %276 = vmatpush1.bf16.msra.mxu0 0
    %277 = vmatprep.subr.bf16.mxu0 0
    %278 = vmatpush1.bf16.msra.mxu0 0
    %279 = vmatprep.subr.bf16.mxu0 0
    %280 = vmatpush1.bf16.msra.mxu0 0
    %281 = vmatprep.subr.bf16.mxu0 0
    %282 = vmatpush1.bf16.msra.mxu0 0
    %283 = vmatprep.subr.bf16.mxu0 0
    %284 = vmatpush1.bf16.msra.mxu0 0
    %285 = vmatprep.subr.bf16.mxu0 0
    %286 = vmatpush1.bf16.msra.mxu0 0
    %287 = vmatprep.subr.bf16.mxu0 0
    %288 = vmatpush1.bf16.msra.mxu0 0
    %289 = vmatprep.subr.bf16.mxu0 0
    %290 = vmatpush1.bf16.msra.mxu0 0
    %291 = vmatprep.subr.bf16.mxu0 0
    %292 = vmatpush1.bf16.msra.mxu0 0
    %293 = vmatprep.mubr.bf16.mxu0 0
    %294 = vmatmul.mubr.bf16.gmra.mrb[0].mxu0 %v259
    %v295 = vpop.f32.mrb[0].mxu0
    %v296 = vadd.f32 0.0, %v295
    %v297 = vpop.f32.mrb[0].mxu0
    %v298 = vpop.f32.mrb[0].mxu0
    %v299 = vpop.f32.mrb[0].mxu0
    %300 = vdwg.mxu0
    %v301 = vadd.f32 %v256, %v296
    %v302 = vtanh.pop %v301
    %s303 = scalar_lea.vmem [#allocation2], 24
    %v304 = vld [vmem:[%s303] sm:$0xff]
    %v305 = vpack.c.bf16 %v302, %v302
    %v307 = vsel %vm136, %v305, 0
    %309 = vmatprep.subr.bf16.mxu0 0
    %310 = vmatpush1.bf16.msra.mxu0 %v158
    %311 = vmatprep.subr.bf16.mxu0 0
    %312 = vmatpush1.bf16.msra.mxu0 %v159
    %313 = vmatprep.subr.bf16.mxu0 0
    %314 = vmatpush1.bf16.msra.mxu0 0
    %315 = vmatprep.subr.bf16.mxu0 0
    %316 = vmatpush1.bf16.msra.mxu0 0
    %317 = vmatprep.subr.bf16.mxu0 0
    %318 = vmatpush1.bf16.msra.mxu0 0
    %319 = vmatprep.subr.bf16.mxu0 0
    %320 = vmatpush1.bf16.msra.mxu0 0
    %321 = vmatprep.subr.bf16.mxu0 0
    %322 = vmatpush1.bf16.msra.mxu0 0
    %323 = vmatprep.subr.bf16.mxu0 0
    %324 = vmatpush1.bf16.msra.mxu0 0
    %325 = vmatprep.subr.bf16.mxu0 0
    %326 = vmatpush1.bf16.msra.mxu0 0
    %327 = vmatprep.subr.bf16.mxu0 0
    %328 = vmatpush1.bf16.msra.mxu0 0
    %329 = vmatprep.subr.bf16.mxu0 0
    %330 = vmatpush1.bf16.msra.mxu0 0
    %331 = vmatprep.subr.bf16.mxu0 0
    %332 = vmatpush1.bf16.msra.mxu0 0
    %333 = vmatprep.subr.bf16.mxu0 0
    %334 = vmatpush1.bf16.msra.mxu0 0
    %335 = vmatprep.subr.bf16.mxu0 0
    %336 = vmatpush1.bf16.msra.mxu0 0
    %337 = vmatprep.subr.bf16.mxu0 0
    %338 = vmatpush1.bf16.msra.mxu0 0
    %339 = vmatprep.subr.bf16.mxu0 0
    %340 = vmatpush1.bf16.msra.mxu0 0
    %341 = vmatprep.mubr.bf16.mxu0 0
    %342 = vmatmul.mubr.bf16.gmra.mrb[0].mxu0 %v307
    %v343 = vpop.f32.mrb[0].mxu0
    %v344 = vadd.f32 0.0, %v343
    %v345 = vpop.f32.mrb[0].mxu0
    %v346 = vpop.f32.mrb[0].mxu0
    %v347 = vpop.f32.mrb[0].mxu0
    %348 = vdwg.mxu0
    %v349 = vadd.f32 %v304, %v344
    %v350 = vtanh.pop %v349
    %s351 = scalar_lea.vmem [#allocation2], 32
    %v352 = vld [vmem:[%s351] sm:$0xff]
    %v353 = vpack.c.bf16 %v350, %v350
    %v355 = vsel %vm136, %v353, 0
    %357 = vmatprep.subr.bf16.mxu0 0
    %358 = vmatpush1.bf16.msra.mxu0 %v158
    %359 = vmatprep.subr.bf16.mxu0 0
    %360 = vmatpush1.bf16.msra.mxu0 %v159
    %361 = vmatprep.subr.bf16.mxu0 0
    %362 = vmatpush1.bf16.msra.mxu0 0
    %363 = vmatprep.subr.bf16.mxu0 0
    %364 = vmatpush1.bf16.msra.mxu0 0
    %365 = vmatprep.subr.bf16.mxu0 0
    %366 = vmatpush1.bf16.msra.mxu0 0
    %367 = vmatprep.subr.bf16.mxu0 0
    %368 = vmatpush1.bf16.msra.mxu0 0
    %369 = vmatprep.subr.bf16.mxu0 0
    %370 = vmatpush1.bf16.msra.mxu0 0
    %371 = vmatprep.subr.bf16.mxu0 0
    %372 = vmatpush1.bf16.msra.mxu0 0
    %373 = vmatprep.subr.bf16.mxu0 0
    %374 = vmatpush1.bf16.msra.mxu0 0
    %375 = vmatprep.subr.bf16.mxu0 0
    %376 = vmatpush1.bf16.msra.mxu0 0
    %377 = vmatprep.subr.bf16.mxu0 0
    %378 = vmatpush1.bf16.msra.mxu0 0
    %379 = vmatprep.subr.bf16.mxu0 0
    %380 = vmatpush1.bf16.msra.mxu0 0
    %381 = vmatprep.subr.bf16.mxu0 0
    %382 = vmatpush1.bf16.msra.mxu0 0
    %383 = vmatprep.subr.bf16.mxu0 0
    %384 = vmatpush1.bf16.msra.mxu0 0
    %385 = vmatprep.subr.bf16.mxu0 0
    %386 = vmatpush1.bf16.msra.mxu0 0
    %387 = vmatprep.subr.bf16.mxu0 0
    %388 = vmatpush1.bf16.msra.mxu0 0
    %389 = vmatprep.mubr.bf16.mxu0 0
    %390 = vmatmul.mubr.bf16.gmra.mrb[0].mxu0 %v355
    %v391 = vpop.f32.mrb[0].mxu0
    %v392 = vadd.f32 0.0, %v391
    %v393 = vpop.f32.mrb[0].mxu0
    %v394 = vpop.f32.mrb[0].mxu0
    %v395 = vpop.f32.mrb[0].mxu0
    %396 = vdwg.mxu0
    %v397 = vadd.f32 %v352, %v392
    %v398 = vtanh.pop %v397
    %s399 = scalar_lea.vmem [#allocation2], 40
    %v400 = vld [vmem:[%s399] sm:$0xff]
    %v401 = vpack.c.bf16 %v398, %v398
    %v403 = vsel %vm136, %v401, 0
    %405 = vmatprep.subr.bf16.mxu0 0
    %406 = vmatpush1.bf16.msra.mxu0 %v158
    %407 = vmatprep.subr.bf16.mxu0 0
    %408 = vmatpush1.bf16.msra.mxu0 %v159
    %409 = vmatprep.subr.bf16.mxu0 0
    %410 = vmatpush1.bf16.msra.mxu0 0
    %411 = vmatprep.subr.bf16.mxu0 0
    %412 = vmatpush1.bf16.msra.mxu0 0
    %413 = vmatprep.subr.bf16.mxu0 0
    %414 = vmatpush1.bf16.msra.mxu0 0
    %415 = vmatprep.subr.bf16.mxu0 0
    %416 = vmatpush1.bf16.msra.mxu0 0
    %417 = vmatprep.subr.bf16.mxu0 0
    %418 = vmatpush1.bf16.msra.mxu0 0
    %419 = vmatprep.subr.bf16.mxu0 0
    %420 = vmatpush1.bf16.msra.mxu0 0
    %421 = vmatprep.subr.bf16.mxu0 0
    %422 = vmatpush1.bf16.msra.mxu0 0
    %423 = vmatprep.subr.bf16.mxu0 0
    %424 = vmatpush1.bf16.msra.mxu0 0
    %425 = vmatprep.subr.bf16.mxu0 0
    %426 = vmatpush1.bf16.msra.mxu0 0
    %427 = vmatprep.subr.bf16.mxu0 0
    %428 = vmatpush1.bf16.msra.mxu0 0
    %429 = vmatprep.subr.bf16.mxu0 0
    %430 = vmatpush1.bf16.msra.mxu0 0
    %431 = vmatprep.subr.bf16.mxu0 0
    %432 = vmatpush1.bf16.msra.mxu0 0
    %433 = vmatprep.subr.bf16.mxu0 0
    %434 = vmatpush1.bf16.msra.mxu0 0
    %435 = vmatprep.subr.bf16.mxu0 0
    %436 = vmatpush1.bf16.msra.mxu0 0
    %437 = vmatprep.mubr.bf16.mxu0 0
    %438 = vmatmul.mubr.bf16.gmra.mrb[0].mxu0 %v403
    %v439 = vpop.f32.mrb[0].mxu0
    %v440 = vadd.f32 0.0, %v439
    %v441 = vpop.f32.mrb[0].mxu0
    %v442 = vpop.f32.mrb[0].mxu0
    %v443 = vpop.f32.mrb[0].mxu0
    %444 = vdwg.mxu0
    %v445 = vadd.f32 %v400, %v440
    %v446 = vtanh.pop %v445
    %s447 = scalar_lea.vmem [#allocation2], 48
    %v448 = vld [vmem:[%s447] sm:$0xff]
    %v449 = vpack.c.bf16 %v446, %v446
    %v451 = vsel %vm136, %v449, 0
    %453 = vmatprep.subr.bf16.mxu0 0
    %454 = vmatpush1.bf16.msra.mxu0 %v158
    %455 = vmatprep.subr.bf16.mxu0 0
    %456 = vmatpush1.bf16.msra.mxu0 %v159
    %457 = vmatprep.subr.bf16.mxu0 0
    %458 = vmatpush1.bf16.msra.mxu0 0
    %459 = vmatprep.subr.bf16.mxu0 0
    %460 = vmatpush1.bf16.msra.mxu0 0
    %461 = vmatprep.subr.bf16.mxu0 0
    %462 = vmatpush1.bf16.msra.mxu0 0
    %463 = vmatprep.subr.bf16.mxu0 0
    %464 = vmatpush1.bf16.msra.mxu0 0
    %465 = vmatprep.subr.bf16.mxu0 0
    %466 = vmatpush1.bf16.msra.mxu0 0
    %467 = vmatprep.subr.bf16.mxu0 0
    %468 = vmatpush1.bf16.msra.mxu0 0
    %469 = vmatprep.subr.bf16.mxu0 0
    %470 = vmatpush1.bf16.msra.mxu0 0
    %471 = vmatprep.subr.bf16.mxu0 0
    %472 = vmatpush1.bf16.msra.mxu0 0
    %473 = vmatprep.subr.bf16.mxu0 0
    %474 = vmatpush1.bf16.msra.mxu0 0
    %475 = vmatprep.subr.bf16.mxu0 0
    %476 = vmatpush1.bf16.msra.mxu0 0
    %477 = vmatprep.subr.bf16.mxu0 0
    %478 = vmatpush1.bf16.msra.mxu0 0
    %479 = vmatprep.subr.bf16.mxu0 0
    %480 = vmatpush1.bf16.msra.mxu0 0
    %481 = vmatprep.subr.bf16.mxu0 0
    %482 = vmatpush1.bf16.msra.mxu0 0
    %483 = vmatprep.subr.bf16.mxu0 0
    %484 = vmatpush1.bf16.msra.mxu0 0
    %485 = vmatprep.mubr.bf16.mxu0 0
    %486 = vmatmul.mubr.bf16.gmra.mrb[0].mxu0 %v451
    %v487 = vpop.f32.mrb[0].mxu0
    %v488 = vadd.f32 0.0, %v487
    %v489 = vpop.f32.mrb[0].mxu0
    %v490 = vpop.f32.mrb[0].mxu0
    %v491 = vpop.f32.mrb[0].mxu0
    %492 = vdwg.mxu0
    %v493 = vadd.f32 %v448, %v488
    %v494 = vtanh.pop %v493
    %s495 = scalar_lea.vmem [#allocation2], 56
    %v496 = vld [vmem:[%s495] sm:$0xff]
    %v497 = vpack.c.bf16 %v494, %v494
    %v499 = vsel %vm136, %v497, 0
    %501 = vmatprep.subr.bf16.mxu0 0
    %502 = vmatpush1.bf16.msra.mxu0 %v158
    %503 = vmatprep.subr.bf16.mxu0 0
    %504 = vmatpush1.bf16.msra.mxu0 %v159
    %505 = vmatprep.subr.bf16.mxu0 0
    %506 = vmatpush1.bf16.msra.mxu0 0
    %507 = vmatprep.subr.bf16.mxu0 0
    %508 = vmatpush1.bf16.msra.mxu0 0
    %509 = vmatprep.subr.bf16.mxu0 0
    %510 = vmatpush1.bf16.msra.mxu0 0
    %511 = vmatprep.subr.bf16.mxu0 0
    %512 = vmatpush1.bf16.msra.mxu0 0
    %513 = vmatprep.subr.bf16.mxu0 0
    %514 = vmatpush1.bf16.msra.mxu0 0
    %515 = vmatprep.subr.bf16.mxu0 0
    %516 = vmatpush1.bf16.msra.mxu0 0
    %517 = vmatprep.subr.bf16.mxu0 0
    %518 = vmatpush1.bf16.msra.mxu0 0
    %519 = vmatprep.subr.bf16.mxu0 0
    %520 = vmatpush1.bf16.msra.mxu0 0
    %521 = vmatprep.subr.bf16.mxu0 0
    %522 = vmatpush1.bf16.msra.mxu0 0
    %523 = vmatprep.subr.bf16.mxu0 0
    %524 = vmatpush1.bf16.msra.mxu0 0
    %525 = vmatprep.subr.bf16.mxu0 0
    %526 = vmatpush1.bf16.msra.mxu0 0
    %527 = vmatprep.subr.bf16.mxu0 0
    %528 = vmatpush1.bf16.msra.mxu0 0
    %529 = vmatprep.subr.bf16.mxu0 0
    %530 = vmatpush1.bf16.msra.mxu0 0
    %531 = vmatprep.subr.bf16.mxu0 0
    %532 = vmatpush1.bf16.msra.mxu0 0
    %533 = vmatprep.mubr.bf16.mxu0 0
    %534 = vmatmul.mubr.bf16.gmra.mrb[0].mxu0 %v499
    %v535 = vpop.f32.mrb[0].mxu0
    %v536 = vadd.f32 0.0, %v535
    %v537 = vpop.f32.mrb[0].mxu0
    %v538 = vpop.f32.mrb[0].mxu0
    %v539 = vpop.f32.mrb[0].mxu0
    %540 = vdwg.mxu0
    %v541 = vadd.f32 %v496, %v536
    %v542 = vtanh.pop %v541
    %v543 = vpack.c.bf16 %v542, %v542
    %v544 = vld [vmem:[%s3] sm:$0xf]
    %v545 = vld [vmem:[%s3 + $0x4] sm:$0xf]
    %v546 = vld [vmem:[%s3 + $0x8] sm:$0xf]
    %v547 = vld [vmem:[%s3 + $0xc] sm:$0xf]
    %v548 = vld [vmem:[%s4] sm:$0x1]
    %v550 = vlaneseq
    %v551 = vshrl.u32 %v550, 7
    %v552 = vsub.s32 0, %v551
    %v553 = vrot.slane %v548, %v552
    %v559 = vunpack.c.l.b16 %v544
    %v560 = vunpack.c.l.b16 %v545
    %v561 = vunpack.c.l.b16 %v546
    %v562 = vunpack.c.l.b16 %v547
    %v563 = vpack.c.b16 %v560, %v559
    %v564 = vpack.c.b16 %v562, %v561
    %v568 = vsel %vm136, %v543, 0
    %570 = vmatprep.subr.bf16.mxu0 0
    %571 = vmatpush1.bf16.msra.mxu0 %v563
    %572 = vmatprep.subr.bf16.mxu0 0
    %573 = vmatpush1.bf16.msra.mxu0 %v564
    %574 = vmatprep.subr.bf16.mxu0 0
    %575 = vmatpush1.bf16.msra.mxu0 0
    %576 = vmatprep.subr.bf16.mxu0 0
    %577 = vmatpush1.bf16.msra.mxu0 0
    %578 = vmatprep.subr.bf16.mxu0 0
    %579 = vmatpush1.bf16.msra.mxu0 0
    %580 = vmatprep.subr.bf16.mxu0 0
    %581 = vmatpush1.bf16.msra.mxu0 0
    %582 = vmatprep.subr.bf16.mxu0 0
    %583 = vmatpush1.bf16.msra.mxu0 0
    %584 = vmatprep.subr.bf16.mxu0 0
    %585 = vmatpush1.bf16.msra.mxu0 0
    %586 = vmatprep.subr.bf16.mxu0 0
    %587 = vmatpush1.bf16.msra.mxu0 0
    %588 = vmatprep.subr.bf16.mxu0 0
    %589 = vmatpush1.bf16.msra.mxu0 0
    %590 = vmatprep.subr.bf16.mxu0 0
    %591 = vmatpush1.bf16.msra.mxu0 0
    %592 = vmatprep.subr.bf16.mxu0 0
    %593 = vmatpush1.bf16.msra.mxu0 0
    %594 = vmatprep.subr.bf16.mxu0 0
    %595 = vmatpush1.bf16.msra.mxu0 0
    %596 = vmatprep.subr.bf16.mxu0 0
    %597 = vmatpush1.bf16.msra.mxu0 0
    %598 = vmatprep.subr.bf16.mxu0 0
    %599 = vmatpush1.bf16.msra.mxu0 0
    %600 = vmatprep.subr.bf16.mxu0 0
    %601 = vmatpush1.bf16.msra.mxu0 0
    %602 = vmatprep.mubr.bf16.mxu0 0
    %603 = vmatmul.mubr.bf16.gmra.mrb[0].mxu0 %v568
    %v604 = vpop.f32.mrb[0].mxu0
    %v605 = vadd.f32 %v553, %v604
    %v606 = vpop.f32.mrb[0].mxu0
    %v607 = vpop.f32.mrb[0].mxu0
    %v608 = vpop.f32.mrb[0].mxu0
    %609 = vdwg.mxu0
    %610 = vst [vmem:[#allocation3] sm:$0xff] %v605
    // Predicated region
    $region22: #{tpu_custom_call.1} parent=1 // pred_check
      _
    $region23: #{tpu_custom_call.1} parent=1 // pred_check_branch
      %612 = sbr.rel (0) target = $region25
    $region24: #{tpu_custom_call.1} parent=1 // pred_region
      %s614 = ssub.s32 128, 128
      %615 = vsyncadd [#allocation4], %s614
      %s617 = sshll.u32 [#allocation3], 4
      %s618 = int_to_ptr.vmem [resolvable:$true] %s617
      %620 = dma.vmem_to_hbm [thread:$0]  %s618, 128, %s5, [#allocation4]
    $region25: #{tpu_custom_call.1} parent=1 // pred_fallthru
      _
    // Predicated region
    $region26: #{tpu_custom_call.1} parent=1 // pred_check
      _
    $region27: #{tpu_custom_call.1} parent=1 // pred_check_branch
      %622 = sbr.rel (0) target = $region29
    $region28: #{tpu_custom_call.1} parent=1 // pred_region
      %623 = dma.done [#allocation4], 128
    $region29: #{tpu_custom_call.1} parent=1 // pred_fallthru
      _
    %624 = vsyncpa [#allocation4], 1

</llo_original>
